<compile_context>
chip_gen: v6e
topology: v6e:2x2x1
jax: 0.10.0
libtpu: 0.0.40
codegen_flags: <defaults>
</compile_context>

<pallas_src>
import functools

import jax
import jax.numpy as jnp
from jax.experimental import pallas as pl
from jax.experimental.pallas import tpu as pltpu


def _round_up(x, m):
    return ((x + m - 1) // m) * m


# ----------------------------- Pallas kernel -----------------------------

def moe_kernel(te_ref, ta_ref, x_ref, w1_ref, w3_ref, w2_ref, cw_ref, o_ref, acc_ref):
    """Grid step = (grouped token tile t, intermediate tile f).

    te_ref : SMEM (num_tiles,) int32  expert id per grouped token tile (scalar prefetch)
    ta_ref : SMEM (num_tiles,) int32  1 if the tile holds >=1 routed assignment, else 0
    x_ref  : VMEM (tT, H)             grouped token tile (resident across f)
    w1_ref : VMEM (H, tF)             expert te[t], F-tile f of gate-proj weight
    w3_ref : VMEM (H, tF)             expert te[t], F-tile f of up-proj weight
    w2_ref : VMEM (tF, H)             expert te[t], F-tile f of down-proj weight
    cw_ref : VMEM (tT, 1)             per-row routing weight of this grouped tile
    o_ref  : VMEM (tT, H)             grouped output tile (resident across f)
    acc_ref: VMEM (tT, H) f32         accumulator scratch
    """
    t = pl.program_id(0)
    f = pl.program_id(1)

    @pl.when(f == 0)
    def _init():
        acc_ref[...] = jnp.zeros_like(acc_ref)

    # Per-tile skip: padding-only tiles cost no MXU work (and their weight DMAs are
    # deduped away by the index_maps below).
    @pl.when(ta_ref[t] > 0)
    def _compute():
        x = x_ref[...]                                                      # (tT, H)
        h1 = jnp.dot(x, w1_ref[...], preferred_element_type=jnp.float32)   # (tT, tF)
        h3 = jnp.dot(x, w3_ref[...], preferred_element_type=jnp.float32)   # (tT, tF)
        h = jax.nn.silu(h1) * h3                                            # SiLU gating, f32
        h = h * cw_ref[...].astype(jnp.float32)      # scale before down-proj (cheaper than on y)
        acc_ref[...] += jnp.dot(h.astype(x.dtype), w2_ref[...],
                                preferred_element_type=jnp.float32)         # (tT, H) f32

    @pl.when(f == pl.num_programs(1) - 1)
    def _finalize():
        o_ref[...] = acc_ref[...].astype(o_ref.dtype)


# ----------------------------- tile / VMEM policy -----------------------------

def _pick_tiles(A, H, F, itemsize, tile_t, tile_f):
    try:
        info = pltpu.get_tpu_info()
        vmem_cap = int(getattr(info, "vmem_capacity_bytes", 64 << 20))
    except Exception:
        vmem_cap = 64 << 20                      # conservative fallback (v7x-sized)
    min_sub = 16 if itemsize == 2 else 8         # bf16 needs 16 sublanes, f32 needs 8

    # Generation-aware defaults: 64 MiB-VMEM parts (v7x) take the smaller F tile.
    if tile_t is None:
        tile_t = 512
    if tile_f is None:
        tile_f = 512 if vmem_cap <= (64 << 20) else 1024

    # Clamp the token tile to the (rounded) number of routed assignments.
    tile_t = min(tile_t, _round_up(A, min_sub))
    tile_t = max(min_sub, _round_up(tile_t, min_sub))

    if F % tile_f != 0:
        tf = (tile_f // 128) * 128
        while tf >= 128 and F % tf != 0:
            tf -= 128
        tile_f = tf if (tf >= 128 and F % tf == 0) else F

    def need(tt, tf):
        blk = (tt * H + 2 * H * tf + tf * H + tt + tt * H) * itemsize
        return 2 * blk + tt * H * 4              # double-buffered blocks + f32 accumulator

    budget = max(int(0.85 * vmem_cap), 16 << 20)
    while need(tile_t, tile_f) > budget:
        if tile_f > 512 and F % (tile_f // 2) == 0:
            tile_f //= 2
        elif tile_t > min_sub:
            tile_t = max(min_sub, _round_up(tile_t // 2, min_sub))
        else:
            break
    return tile_t, tile_f, budget


# ----------------------------- grouped MoE FFN wrapper -----------------------------

def grouped_moe_ffn(x, w1, w3, w2, topk_idx, topk_vals, *, tile_t=None, tile_f=None):
    """Megablox-style grouped sparse MoE FFN.

    x: (T, H); w1, w3: (E, H, F); w2: (E, F, H)
    topk_idx: (T, k) int expert ids; topk_vals: (T, k) renormalized weights (x.dtype)
    Returns (T, H).
    """
    T, H = x.shape
    E, _, F = w1.shape
    top_k = topk_idx.shape[-1]
    A = T * top_k
    dtype = x.dtype
    itemsize = jnp.dtype(dtype).itemsize

    tile_t, tile_f, vmem_limit = _pick_tiles(A, H, F, itemsize, tile_t, tile_f)
    A_pad = _round_up(A + E * (tile_t - 1), tile_t)     # static worst-case grouped length
    num_tiles = A_pad // tile_t
    f_tiles = F // tile_f

    # ---- host-side token grouping: sort assignments by expert, pad groups to tiles ----
    expert_flat = topk_idx.reshape(-1).astype(jnp.int32)                   # (A,)
    weight_flat = topk_vals.reshape(-1)                                     # (A,)
    token_flat = jnp.arange(A, dtype=jnp.int32) // top_k                    # (A,)

    order = jnp.argsort(expert_flat)                                        # (A,)
    sorted_expert = expert_flat[order]
    sorted_token = token_flat[order]
    sorted_weight = weight_flat[order]

    counts = jnp.zeros((E,), jnp.int32).at[expert_flat].add(1)              # (E,)
    padded_counts = ((counts + tile_t - 1) // tile_t) * tile_t
    group_start = jnp.cumsum(counts) - counts
    padded_start = jnp.cumsum(padded_counts) - padded_counts
    rank = jnp.arange(A, dtype=jnp.int32) - group_start[sorted_expert]
    dest = padded_start[sorted_expert] + rank                               # (A,) unique rows

    src_token = jnp.zeros((A_pad,), jnp.int32).at[dest].set(sorted_token)
    row_weight = jnp.zeros((A_pad,), dtype).at[dest].set(sorted_weight).reshape(A_pad, 1)
    row_valid = jnp.zeros((A_pad,), jnp.int32).at[dest].set(1)
    row_expert = jnp.zeros((A_pad,), jnp.int32).at[dest].set(sorted_expert)

    x_grouped = x[src_token]                                                # (A_pad, H)

    tile_active = (row_valid.reshape(num_tiles, tile_t).sum(axis=1) > 0).astype(jnp.int32)
    tile_expert_first = row_expert.reshape(num_tiles, tile_t)[:, 0]
    n_active = jnp.sum(tile_active)
    last_expert = tile_expert_first[jnp.maximum(n_active - 1, 0)]
    # Inactive (trailing padding) tiles alias the last active expert so their weight DMAs
    # dedup against already-fetched blocks instead of streaming fresh weights.
    tile_expert = jnp.where(tile_active > 0, tile_expert_first, last_expert).astype(jnp.int32)

    # ---- index maps (scalar-prefetched tile -> expert map; inactive tiles pin f to 0) ----
    def x_map(t, f, te, ta): return (t, 0)
    def w1_map(t, f, te, ta): return (te[t], 0, f * ta[t])
    def w3_map(t, f, te, ta): return (te[t], 0, f * ta[t])
    def w2_map(t, f, te, ta): return (te[t], f * ta[t], 0)
    def cw_map(t, f, te, ta): return (t, 0)
    def out_map(t, f, te, ta): return (t, 0)

    cost = pl.CostEstimate(
        flops=6 * A * H * F,
        transcendentals=A * F,
        # one expert's weights streamed per grouped tile + grouped activations in/out
        bytes_accessed=(num_tiles * 3 * H * F + 2 * A_pad * H + A_pad) * itemsize,
    )

    out_grouped = pl.pallas_call(
        moe_kernel,
        out_shape=jax.ShapeDtypeStruct((A_pad, H), dtype),
        grid_spec=pltpu.PrefetchScalarGridSpec(
            num_scalar_prefetch=2,                          # tile_expert, tile_active -> SMEM
            grid=(num_tiles, f_tiles),
            in_specs=[
                pl.BlockSpec((tile_t, H), x_map),           # grouped tokens
                pl.BlockSpec((None, H, tile_f), w1_map),    # w1[e] (gate proj)
                pl.BlockSpec((None, H, tile_f), w3_map),    # w3[e] (up proj)
                pl.BlockSpec((None, tile_f, H), w2_map),    # w2[e] (down proj)
                pl.BlockSpec((tile_t, 1), cw_map),          # per-row routing weight
            ],
            out_specs=pl.BlockSpec((tile_t, H), out_map),
            scratch_shapes=[pltpu.VMEM((tile_t, H), jnp.float32)],
        ),
        compiler_params=pltpu.CompilerParams(
            dimension_semantics=("parallel", "arbitrary"),
            vmem_limit_bytes=int(vmem_limit),
        ),
        cost_estimate=cost,
    )(tile_expert, tile_active, x_grouped, w1, w3, w2, row_weight)

    # ---- scatter-free combine: inverse gather + sum over the top-k assignments ----
    dest_of_flat = jnp.zeros((A,), jnp.int32).at[order].set(dest)
    out = out_grouped[dest_of_flat].astype(jnp.float32).reshape(T, top_k, H).sum(axis=1)
    return out.astype(dtype)


# ----------------------------- full forward -----------------------------

@functools.partial(jax.jit, static_argnames=("top_k", "tile_t", "tile_f"))
def sparse_moe_forward(hidden_states, gate_w, w1, w3, w2, top_k,
                       tile_t=None, tile_f=None):
    """Forward pass of SparseMoeWrapper with routing_strategy='TOP-K'.

    hidden_states: (B, S, H) -> returns (final_hidden_states (B, S, H), router_logits (B*S, E))
    """
    B, S, H = hidden_states.shape
    x = hidden_states.reshape(-1, H)                                        # (T, H)

    # Router logits: tiny matmul, left to XLA (fuses with softmax/top-k glue).
    router_logits = jnp.dot(x, gate_w, preferred_element_type=jnp.float32)  # (T, E) f32

    routing_weights = jax.nn.softmax(router_logits, axis=-1)
    topk_vals, topk_idx = jax.lax.top_k(routing_weights, top_k)             # (T, k)
    topk_vals = topk_vals / topk_vals.sum(axis=-1, keepdims=True)
    topk_vals = topk_vals.astype(hidden_states.dtype)

    out = grouped_moe_ffn(x, w1, w3, w2, topk_idx, topk_vals,
                          tile_t=tile_t, tile_f=tile_f)                     # (T, H)
    return out.reshape(B, S, H), router_logits


# ----------------------------- reference (pure JAX) -----------------------------

def reference_forward(hidden_states, gate_w, w1, w3, w2, top_k):
    B, S, H = hidden_states.shape
    E = gate_w.shape[1]
    x = hidden_states.reshape(-1, H)
    logits = jnp.dot(x, gate_w, preferred_element_type=jnp.float32)
    probs = jax.nn.softmax(logits, axis=-1)
    vals, idx = jax.lax.top_k(probs, top_k)
    vals = vals / vals.sum(axis=-1, keepdims=True)
    vals = vals.astype(x.dtype)
    out = jnp.zeros(x.shape, jnp.float32)
    for e in range(E):
        w = jnp.sum(jnp.where(idx == e, vals, 0.0), axis=-1)                # (T,)
        h1 = jnp.dot(x, w1[e], preferred_element_type=jnp.float32)
        h3 = jnp.dot(x, w3[e], preferred_element_type=jnp.float32)
        h = jax.nn.silu(h1) * h3
        y = jnp.dot(h.astype(x.dtype), w2[e], preferred_element_type=jnp.float32)
        out = out + y * w[:, None].astype(jnp.float32)
    return out.astype(x.dtype).reshape(B, S, H), logits


# ----------------------------- main -----------------------------

if __name__ == "__main__":
    # Small config consistent with the module: hidden_size=32, intermediate_size=64,
    # num_local_experts=8, num_experts_per_tok=2; batch=2, seq=8.
    B, S, H, F, E, TOP_K = 2, 8, 32, 64, 8, 2

    key = jax.random.PRNGKey(0)
    k_x, k_g, k1, k3, k2 = jax.random.split(key, 5)

    hidden_states = jax.random.normal(k_x, (B, S, H), dtype=jnp.float32)
    gate_w = jax.random.normal(k_g, (H, E), dtype=jnp.float32) * 0.1
    w1 = jax.random.normal(k1, (E, H, F), dtype=jnp.float32) * 0.1
    w3 = jax.random.normal(k3, (E, H, F), dtype=jnp.float32) * 0.1
    w2 = jax.random.normal(k2, (E, F, H), dtype=jnp.float32) * 0.1

    # f32 check (tight tolerance); small tile_t exercises the grouped multi-tile grid.
    out, logits = sparse_moe_forward(hidden_states, gate_w, w1, w3, w2, TOP_K, tile_t=8)
    out = jax.block_until_ready(out)
    logits = jax.block_until_ready(logits)

    ref_out, ref_logits = reference_forward(hidden_states, gate_w, w1, w3, w2, TOP_K)
    assert out.shape == (B, S, H) and logits.shape == (B * S, E)
    assert jnp.allclose(out, ref_out, rtol=1e-4, atol=1e-4)
    assert jnp.allclose(logits, ref_logits, rtol=1e-4, atol=1e-4)

    # bf16 check (matmuls in bf16 with f32 MXU accumulation; tile_t auto-rounds 8 -> 16).
    hs_bf = hidden_states.astype(jnp.bfloat16)
    gw_bf = gate_w.astype(jnp.bfloat16)
    w1_bf = w1.astype(jnp.bfloat16)
    w3_bf = w3.astype(jnp.bfloat16)
    w2_bf = w2.astype(jnp.bfloat16)
    out_bf, _ = sparse_moe_forward(hs_bf, gw_bf, w1_bf, w3_bf, w2_bf, TOP_K, tile_t=8)
    out_bf = jax.block_until_ready(out_bf)
    ref_out_bf, _ = reference_forward(hs_bf, gw_bf, w1_bf, w3_bf, w2_bf, TOP_K)
    assert jnp.allclose(out_bf.astype(jnp.float32), ref_out_bf.astype(jnp.float32),
                        rtol=3e-2, atol=3e-2)

    print("KERNEL_OK")
</pallas_src>

<mosaic_0001>
module attributes {stable_mosaic.version = 11 : i64} {
  func.func private @main(%arg0: i32) attributes {dimension_semantics = [#tpu.dimension_semantics<core_parallel>], iteration_bounds = array<i64: 2>, tpu.core_type = #tpu.core_type<sc_scalar_subcore>, window_params = []} {
    return
  }
}

module attributes {stable_mosaic.version = 11 : i64} {
  func.func private @main(%arg0: i32) attributes {dimension_semantics = [#tpu.dimension_semantics<core_parallel>], iteration_bounds = array<i64: 2>, tpu.core_type = #tpu.core_type<sc_scalar_subcore>, window_params = []} {
    return
  }
}

module attributes {stable_mosaic.version = 11 : i64} {
  func.func @moe_kernel(%arg0: i32, %arg1: i32, %arg2: memref<11xi32, #tpu.memory_space<smem>>, %arg3: memref<11xi32, #tpu.memory_space<smem>>, %arg4: memref<8x32xf32, #tpu.memory_space<vmem>>, %arg5: memref<1x32x64xf32, #tpu.memory_space<vmem>>, %arg6: memref<1x32x64xf32, #tpu.memory_space<vmem>>, %arg7: memref<1x64x32xf32, #tpu.memory_space<vmem>>, %arg8: memref<8x1xf32, #tpu.memory_space<vmem>>, %arg9: memref<8x32xf32, #tpu.memory_space<vmem>>, %arg10: memref<8x32xf32, #tpu.memory_space<vmem>>) attributes {dimension_semantics = [#tpu.dimension_semantics<parallel>, #tpu.dimension_semantics<arbitrary>], iteration_bounds = array<i64: 11, 1>, scalar_prefetch = 2 : i64, scratch_operands = 1 : i64, tpu.core_type = #tpu.core_type<tc>, window_params = [{transform_indices = @transform_0, window_bounds = array<i64: 8, 32>}, {transform_indices = @transform_1, window_bounds = array<i64: 1, 32, 64>}, {transform_indices = @transform_2, window_bounds = array<i64: 1, 32, 64>}, {transform_indices = @transform_3, window_bounds = array<i64: 1, 64, 32>}, {transform_indices = @transform_4, window_bounds = array<i64: 8, 1>}, {transform_indices = @transform_5, window_bounds = array<i64: 8, 32>}]} {
    %c0_i32 = arith.constant 0 : i32
    %0 = arith.cmpi eq, %arg1, %c0_i32 : i32
    %1 = arith.extui %0 : i1 to i32
    %c0_i32_0 = arith.constant 0 : i32
    %2 = arith.cmpi ne, %1, %c0_i32_0 : i32
    scf.if %2 {
      %cst = arith.constant 0.000000e+00 : f32
      %11 = vector.broadcast %cst : f32 to vector<8x32xf32>
      %c0 = arith.constant 0 : index
      %c0_5 = arith.constant 0 : index
      %12 = vector.load %arg10[%c0, %c0_5] : memref<8x32xf32, #tpu.memory_space<vmem>>, vector<8x32xf32>
      tpu.vector_store %arg10[%c0, %c0_5], %11 {strides = array<i32>} : memref<8x32xf32, #tpu.memory_space<vmem>>, vector<8x32xf32>,
    } else {
    }
    %3 = arith.index_cast %arg0 : i32 to index
    %4 = memref.load %arg3[%3] : memref<11xi32, #tpu.memory_space<smem>>
    %c0_i32_1 = arith.constant 0 : i32
    %5 = arith.cmpi sgt, %4, %c0_i32_1 : i32
    %6 = arith.extui %5 : i1 to i32
    %c0_i32_2 = arith.constant 0 : i32
    %7 = arith.cmpi ne, %6, %c0_i32_2 : i32
    scf.if %7 {
      %c0 = arith.constant 0 : index
      %c0_5 = arith.constant 0 : index
      %11 = vector.load %arg4[%c0, %c0_5] : memref<8x32xf32, #tpu.memory_space<vmem>>, vector<8x32xf32>
      %c0_6 = arith.constant 0 : index
      %c0_7 = arith.constant 0 : index
      %c0_8 = arith.constant 0 : index
      %12 = vector.load %arg5[%c0_6, %c0_7, %c0_8] : memref<1x32x64xf32, #tpu.memory_space<vmem>>, vector<1x32x64xf32>
      %13 = vector.shape_cast %12 : vector<1x32x64xf32> to vector<32x64xf32>
      %cst = arith.constant dense<0.000000e+00> : vector<8x64xf32>
      %14 = tpu.matmul %11, %13, %cst {dimension_numbers = #tpu.dot_dimension_numbers<[1], [0], [0], [1], [0, 0, 1, 1], [], []>} : vector<8x32xf32>, vector<32x64xf32>, vector<8x64xf32> -> vector<8x64xf32>
      %c0_9 = arith.constant 0 : index
      %c0_10 = arith.constant 0 : index
      %c0_11 = arith.constant 0 : index
      %15 = vector.load %arg6[%c0_9, %c0_10, %c0_11] : memref<1x32x64xf32, #tpu.memory_space<vmem>>, vector<1x32x64xf32>
      %16 = vector.shape_cast %15 : vector<1x32x64xf32> to vector<32x64xf32>
      %cst_12 = arith.constant dense<0.000000e+00> : vector<8x64xf32>
      %17 = tpu.matmul %11, %16, %cst_12 {dimension_numbers = #tpu.dot_dimension_numbers<[1], [0], [0], [1], [0, 0, 1, 1], [], []>} : vector<8x32xf32>, vector<32x64xf32>, vector<8x64xf32> -> vector<8x64xf32>
      %18 = arith.negf %14 : vector<8x64xf32>
      %19 = math.exp %18 : vector<8x64xf32>
      %cst_13 = arith.constant 1.000000e+00 : f32
      %20 = vector.broadcast %cst_13 : f32 to vector<8x64xf32>
      %21 = arith.addf %20, %19 : vector<8x64xf32>
      %22 = arith.divf %20, %21 : vector<8x64xf32>
      %23 = arith.mulf %14, %22 : vector<8x64xf32>
      %24 = arith.mulf %23, %17 : vector<8x64xf32>
      %c0_14 = arith.constant 0 : index
      %c0_15 = arith.constant 0 : index
      %25 = vector.load %arg8[%c0_14, %c0_15] : memref<8x1xf32, #tpu.memory_space<vmem>>, vector<8x1xf32>
      %26 = vector.broadcast %25 : vector<8x1xf32> to vector<8x64xf32>
      %27 = arith.mulf %24, %26 : vector<8x64xf32>
      %c0_16 = arith.constant 0 : index
      %c0_17 = arith.constant 0 : index
      %28 = vector.load %arg10[%c0_16, %c0_17] : memref<8x32xf32, #tpu.memory_space<vmem>>, vector<8x32xf32>
      %c0_18 = arith.constant 0 : index
      %c0_19 = arith.constant 0 : index
      %c0_20 = arith.constant 0 : index
      %29 = vector.load %arg7[%c0_18, %c0_19, %c0_20] : memref<1x64x32xf32, #tpu.memory_space<vmem>>, vector<1x64x32xf32>
      %30 = vector.shape_cast %29 : vector<1x64x32xf32> to vector<64x32xf32>
      %cst_21 = arith.constant dense<0.000000e+00> : vector<8x32xf32>
      %31 = tpu.matmul %27, %30, %cst_21 {dimension_numbers = #tpu.dot_dimension_numbers<[1], [0], [0], [1], [0, 0, 1, 1], [], []>} : vector<8x64xf32>, vector<64x32xf32>, vector<8x32xf32> -> vector<8x32xf32>
      %32 = arith.addf %28, %31 : vector<8x32xf32>
      %c0_22 = arith.constant 0 : index
      %c0_23 = arith.constant 0 : index
      %33 = vector.load %arg10[%c0_22, %c0_23] : memref<8x32xf32, #tpu.memory_space<vmem>>, vector<8x32xf32>
      tpu.vector_store %arg10[%c0_22, %c0_23], %32 {strides = array<i32>} : memref<8x32xf32, #tpu.memory_space<vmem>>, vector<8x32xf32>,
    } else {
    }
    %c0_i32_3 = arith.constant 0 : i32
    %8 = arith.cmpi eq, %arg1, %c0_i32_3 : i32
    %9 = arith.extui %8 : i1 to i32
    %c0_i32_4 = arith.constant 0 : i32
    %10 = arith.cmpi ne, %9, %c0_i32_4 : i32
    scf.if %10 {
      %c0 = arith.constant 0 : index
      %c0_5 = arith.constant 0 : index
      %11 = vector.load %arg10[%c0, %c0_5] : memref<8x32xf32, #tpu.memory_space<vmem>>, vector<8x32xf32>
      %c0_6 = arith.constant 0 : index
      %c0_7 = arith.constant 0 : index
      %12 = vector.load %arg9[%c0_6, %c0_7] : memref<8x32xf32, #tpu.memory_space<vmem>>, vector<8x32xf32>
      tpu.vector_store %arg9[%c0_6, %c0_7], %11 {strides = array<i32>} : memref<8x32xf32, #tpu.memory_space<vmem>>, vector<8x32xf32>,
    } else {
    }
    return
  }
  func.func @transform_0(%arg0: i32, %arg1: i32, %arg2: memref<11xi32, #tpu.memory_space<smem>>, %arg3: memref<11xi32, #tpu.memory_space<smem>>) -> (i32, i32) {
    %c0_i32 = arith.constant 0 : i32
    %c0_i32_0 = arith.constant 0 : i32
    return %arg0, %c0_i32 : i32, i32
  }
  func.func @transform_1(%arg0: i32, %arg1: i32, %arg2: memref<11xi32, #tpu.memory_space<smem>>, %arg3: memref<11xi32, #tpu.memory_space<smem>>) -> (i32, i32, i32) {
    %0 = arith.index_cast %arg0 : i32 to index
    %1 = memref.load %arg2[%0] : memref<11xi32, #tpu.memory_space<smem>>
    %2 = arith.index_cast %arg0 : i32 to index
    %3 = memref.load %arg3[%2] : memref<11xi32, #tpu.memory_space<smem>>
    %4 = arith.muli %arg1, %3 : i32
    %c0_i32 = arith.constant 0 : i32
    %c0_i32_0 = arith.constant 0 : i32
    return %1, %c0_i32, %4 : i32, i32, i32
  }
  func.func @transform_2(%arg0: i32, %arg1: i32, %arg2: memref<11xi32, #tpu.memory_space<smem>>, %arg3: memref<11xi32, #tpu.memory_space<smem>>) -> (i32, i32, i32) {
    %0 = arith.index_cast %arg0 : i32 to index
    %1 = memref.load %arg2[%0] : memref<11xi32, #tpu.memory_space<smem>>
    %2 = arith.index_cast %arg0 : i32 to index
    %3 = memref.load %arg3[%2] : memref<11xi32, #tpu.memory_space<smem>>
    %4 = arith.muli %arg1, %3 : i32
    %c0_i32 = arith.constant 0 : i32
    %c0_i32_0 = arith.constant 0 : i32
    return %1, %c0_i32, %4 : i32, i32, i32
  }
  func.func @transform_3(%arg0: i32, %arg1: i32, %arg2: memref<11xi32, #tpu.memory_space<smem>>, %arg3: memref<11xi32, #tpu.memory_space<smem>>) -> (i32, i32, i32) {
    %0 = arith.index_cast %arg0 : i32 to index
    %1 = memref.load %arg2[%0] : memref<11xi32, #tpu.memory_space<smem>>
    %2 = arith.index_cast %arg0 : i32 to index
    %3 = memref.load %arg3[%2] : memref<11xi32, #tpu.memory_space<smem>>
    %4 = arith.muli %arg1, %3 : i32
    %c0_i32 = arith.constant 0 : i32
    %c0_i32_0 = arith.constant 0 : i32
    return %1, %4, %c0_i32 : i32, i32, i32
  }
  func.func @transform_4(%arg0: i32, %arg1: i32, %arg2: memref<11xi32, #tpu.memory_space<smem>>, %arg3: memref<11xi32, #tpu.memory_space<smem>>) -> (i32, i32) {
    %c0_i32 = arith.constant 0 : i32
    %c0_i32_0 = arith.constant 0 : i32
    return %arg0, %c0_i32 : i32, i32
  }
  func.func @transform_5(%arg0: i32, %arg1: i32, %arg2: memref<11xi32, #tpu.memory_space<smem>>, %arg3: memref<11xi32, #tpu.memory_space<smem>>) -> (i32, i32) {
    %c0_i32 = arith.constant 0 : i32
    %c0_i32_0 = arith.constant 0 : i32
    return %arg0, %c0_i32 : i32, i32
  }
}

</mosaic_0001>

<llo_original>
// kernel: sparse_moe_forward.1
$region0: #{sparse_moe_forward.1}
  #allocation0 [shape = 'u32[]', space=smem, size = 0x4, offset = 0x4, fixed_abs, tag = 'smem constant byte address 0x4 - core index']
  #allocation1 [shape = 'u32[144,128]{1,0:T(1,128)}', space=vmem, size = 0x12000, scoped, tag = 'internal scratch']
  #allocation2 [shape = 'f32[8,32]{1,0:T(8,128)}', space=vmem, size = 0x1000, scoped, tag = 'scratch operand']
  #allocation3 [shape = 's32[1]{0}', space=sflag, size = 0x4, scoped, tag = 'scoped memory for sparse_moe_forward.1']
  #allocation4 [shape = 'u8[512]{0}', space=smem, size = 0x200, scoped, tag = 'prefetched SMEM operand 0']
  #allocation5 [shape = 'u8[512]{0}', space=smem, size = 0x200, scoped, tag = 'prefetched SMEM operand 1']
  %s0 = inlined_call_operand.vmem [shape: s32[11], index: 0, kind: input, shape index: {}]
  %s1 = inlined_call_operand.vmem [shape: s32[11], index: 1, kind: input, shape index: {}]
  %s2 = inlined_call_operand.vmem [shape: f32[88,32], index: 2, kind: input, shape index: {}]
  %s3 = inlined_call_operand.vmem [shape: f32[8,32,64], index: 3, kind: input, shape index: {}]
  %s4 = inlined_call_operand.vmem [shape: f32[8,32,64], index: 4, kind: input, shape index: {}]
  %s5 = inlined_call_operand.vmem [shape: f32[8,64,32], index: 5, kind: input, shape index: {}]
  %s6 = inlined_call_operand.vmem [shape: f32[88,1], index: 6, kind: input, shape index: {}]
  %s7 = inlined_call_operand.vmem [shape: f32[88,32], index: 7, kind: output, shape index: {}]
  %s8 = sld [smem:[#allocation0]]
  $region65: #{sparse_moe_forward.1} parent=0
    _
  %s10 = ssub.s32 1, %s8
  %s11 = scalar_select 0, %s10, %s8
  %s12 = sshll.u32 %s0, 4
  %s13 = int_to_ptr.vmem [resolvable:$true] %s12
  %15 = dma.vmem_to_smem %s13, 16, [#allocation4], [#allocation3]
  %s16 = sshll.u32 %s1, 4
  %s17 = int_to_ptr.vmem [resolvable:$true] %s16
  %19 = dma.vmem_to_smem %s17, 16, [#allocation5], [#allocation3]
  %20 = dma.done [#allocation3], 32
  %21 = sfence
  loop: start=0, step=1, limit=13
  $region2: #{sparse_moe_forward.1} parent=0 // loop_pre_header
    _
  $region3: #{sparse_moe_forward.1} parent=0 // loop_header
    %s23 = sphi 0, %s27
    %p24 = scmp.ge.s32.totalorder %s23, 13
    %s30 = sphi 0, %s42
    %s31 = sphi 0, %s38
    %s32 = sphi 0, %s30
    %s33 = sphi 0, %s31
    %s34 = sphi 0, %s32
    %s35 = sphi 0, %s33
    %s45 = sphi 0, %s47
    %s48 = sphi 0, %s45
    %s49 = sphi 0, %s48
    %s65 = sphi 0, %s49
    %s79 = sphi 0, %s81
    %s82 = sphi 0, %s79
    %s83 = sphi 0, %s82
    %s99 = sphi 0, %s83
    %s113 = sphi 0, %s115
    %s116 = sphi 0, %s113
    %s117 = sphi 0, %s116
    %s133 = sphi 0, %s117
    %s147 = sphi 0, %s149
    %s150 = sphi 0, %s147
    %s151 = sphi 0, %s150
    %s167 = sphi 0, %s151
    %s173 = sphi 0, %s175
    %s176 = sphi 0, %s173
    %s177 = sphi 0, %s176
    %s193 = sphi 0, %s177
    %s199 = sphi 0, %s201
    %s202 = sphi 0, %s199
    %s203 = sphi 0, %s202
    %s219 = sphi 0, %s203
  $region4: #{sparse_moe_forward.1} parent=0 // loop_header_branch
    %26 = sbr.rel (%p24) target = $region8
  $region5: #{sparse_moe_forward.1} parent=0 // loop_body
    %s28 = ssub.s32 %s23, 1
    %s29 = ssub.s32 %s23, 2
    %s36 = sadd.s32 1, %s31
    %p37 = scmp.ge.s32.totalorder %s36, 1
    %s38 = scalar_select %p37, 0, %s36
    %s39 = sadd.s32 1, %s30
    %s40 = scalar_select %p37, %s39, %s30
    %p41 = scmp.ge.s32.totalorder %s40, 11
    %s42 = scalar_select %p41, 0, %s40
    %s43 = ssub.s32 %s30, %s42
    %p44 = scmp.eq.s32.totalorder %s43, 0
    %s46 = sadd.s32 %s45, 1
    %s47 = scalar_select %p44, %s45, %s46
    %p50 = pneg %p44
    %p51 = scmp.eq.s32.totalorder %s23, 10
    %p52 = por %p50, %p51
    %p53 = scmp.ne.s32.totalorder %s45, %s48
    %p54 = scmp.eq.s32.totalorder %s23, 0
    %p55 = por %p53, %p54
    %p56 = scmp.ne.s32.totalorder %s45, %s48
    %p57 = scmp.eq.s32.totalorder %s28, 10
    %p58 = por %p56, %p57
    %p59 = scmp.ne.s32.totalorder %s48, %s49
    %p60 = scmp.eq.s32.totalorder %s28, 0
    %p61 = por %p59, %p60
    %p62 = scmp.ne.s32.totalorder %s48, %s49
    %p63 = scmp.eq.s32.totalorder %s29, 10
    %p64 = por %p62, %p63
    %p66 = scmp.ne.s32.totalorder %s49, %s65
    %p67 = scmp.eq.s32.totalorder %s29, 0
    %p68 = por %p66, %p67
    %s69 = sld [smem:[#allocation4 + %s30]]
    %s70 = sld [smem:[#allocation5 + %s30]]
    %s71 = smul.u32 %s31, %s70
    %s72 = sld [smem:[#allocation4 + %s42]]
    %s73 = sld [smem:[#allocation5 + %s42]]
    %s74 = smul.u32 %s38, %s73
    %s75 = ssub.s32 %s69, %s72
    %s76 = ssub.s32 %s71, %s74
    %s77 = sor.u32 %s75, %s76
    %p78 = scmp.eq.s32.totalorder %s77, 0
    %s80 = sadd.s32 %s79, 1
    %s81 = scalar_select %p78, %s79, %s80
    %p84 = pneg %p78
    %p85 = scmp.eq.s32.totalorder %s23, 10
    %p86 = por %p84, %p85
    %p87 = scmp.ne.s32.totalorder %s79, %s82
    %p88 = scmp.eq.s32.totalorder %s23, 0
    %p89 = por %p87, %p88
    %p90 = scmp.ne.s32.totalorder %s79, %s82
    %p91 = scmp.eq.s32.totalorder %s28, 10
    %p92 = por %p90, %p91
    %p93 = scmp.ne.s32.totalorder %s82, %s83
    %p94 = scmp.eq.s32.totalorder %s28, 0
    %p95 = por %p93, %p94
    %p96 = scmp.ne.s32.totalorder %s82, %s83
    %p97 = scmp.eq.s32.totalorder %s29, 10
    %p98 = por %p96, %p97
    %p100 = scmp.ne.s32.totalorder %s83, %s99
    %p101 = scmp.eq.s32.totalorder %s29, 0
    %p102 = por %p100, %p101
    %s103 = sld [smem:[#allocation4 + %s30]]
    %s104 = sld [smem:[#allocation5 + %s30]]
    %s105 = smul.u32 %s31, %s104
    %s106 = sld [smem:[#allocation4 + %s42]]
    %s107 = sld [smem:[#allocation5 + %s42]]
    %s108 = smul.u32 %s38, %s107
    %s109 = ssub.s32 %s103, %s106
    %s110 = ssub.s32 %s105, %s108
    %s111 = sor.u32 %s109, %s110
    %p112 = scmp.eq.s32.totalorder %s111, 0
    %s114 = sadd.s32 %s113, 1
    %s115 = scalar_select %p112, %s113, %s114
    %p118 = pneg %p112
    %p119 = scmp.eq.s32.totalorder %s23, 10
    %p120 = por %p118, %p119
    %p121 = scmp.ne.s32.totalorder %s113, %s116
    %p122 = scmp.eq.s32.totalorder %s23, 0
    %p123 = por %p121, %p122
    %p124 = scmp.ne.s32.totalorder %s113, %s116
    %p125 = scmp.eq.s32.totalorder %s28, 10
    %p126 = por %p124, %p125
    %p127 = scmp.ne.s32.totalorder %s116, %s117
    %p128 = scmp.eq.s32.totalorder %s28, 0
    %p129 = por %p127, %p128
    %p130 = scmp.ne.s32.totalorder %s116, %s117
    %p131 = scmp.eq.s32.totalorder %s29, 10
    %p132 = por %p130, %p131
    %p134 = scmp.ne.s32.totalorder %s117, %s133
    %p135 = scmp.eq.s32.totalorder %s29, 0
    %p136 = por %p134, %p135
    %s137 = sld [smem:[#allocation4 + %s30]]
    %s138 = sld [smem:[#allocation5 + %s30]]
    %s139 = smul.u32 %s31, %s138
    %s140 = sld [smem:[#allocation4 + %s42]]
    %s141 = sld [smem:[#allocation5 + %s42]]
    %s142 = smul.u32 %s38, %s141
    %s143 = ssub.s32 %s137, %s140
    %s144 = ssub.s32 %s139, %s142
    %s145 = sor.u32 %s143, %s144
    %p146 = scmp.eq.s32.totalorder %s145, 0
    %s148 = sadd.s32 %s147, 1
    %s149 = scalar_select %p146, %s147, %s148
    %p152 = pneg %p146
    %p153 = scmp.eq.s32.totalorder %s23, 10
    %p154 = por %p152, %p153
    %p155 = scmp.ne.s32.totalorder %s147, %s150
    %p156 = scmp.eq.s32.totalorder %s23, 0
    %p157 = por %p155, %p156
    %p158 = scmp.ne.s32.totalorder %s147, %s150
    %p159 = scmp.eq.s32.totalorder %s28, 10
    %p160 = por %p158, %p159
    %p161 = scmp.ne.s32.totalorder %s150, %s151
    %p162 = scmp.eq.s32.totalorder %s28, 0
    %p163 = por %p161, %p162
    %p164 = scmp.ne.s32.totalorder %s150, %s151
    %p165 = scmp.eq.s32.totalorder %s29, 10
    %p166 = por %p164, %p165
    %p168 = scmp.ne.s32.totalorder %s151, %s167
    %p169 = scmp.eq.s32.totalorder %s29, 0
    %p170 = por %p168, %p169
    %s171 = ssub.s32 %s30, %s42
    %p172 = scmp.eq.s32.totalorder %s171, 0
    %s174 = sadd.s32 %s173, 1
    %s175 = scalar_select %p172, %s173, %s174
    %p178 = pneg %p172
    %p179 = scmp.eq.s32.totalorder %s23, 10
    %p180 = por %p178, %p179
    %p181 = scmp.ne.s32.totalorder %s173, %s176
    %p182 = scmp.eq.s32.totalorder %s23, 0
    %p183 = por %p181, %p182
    %p184 = scmp.ne.s32.totalorder %s173, %s176
    %p185 = scmp.eq.s32.totalorder %s28, 10
    %p186 = por %p184, %p185
    %p187 = scmp.ne.s32.totalorder %s176, %s177
    %p188 = scmp.eq.s32.totalorder %s28, 0
    %p189 = por %p187, %p188
    %p190 = scmp.ne.s32.totalorder %s176, %s177
    %p191 = scmp.eq.s32.totalorder %s29, 10
    %p192 = por %p190, %p191
    %p194 = scmp.ne.s32.totalorder %s177, %s193
    %p195 = scmp.eq.s32.totalorder %s29, 0
    %p196 = por %p194, %p195
    %s197 = ssub.s32 %s30, %s42
    %p198 = scmp.eq.s32.totalorder %s197, 0
    %s200 = sadd.s32 %s199, 1
    %s201 = scalar_select %p198, %s199, %s200
    %p204 = pneg %p198
    %p205 = scmp.eq.s32.totalorder %s23, 10
    %p206 = por %p204, %p205
    %p207 = scmp.ne.s32.totalorder %s199, %s202
    %p208 = scmp.eq.s32.totalorder %s23, 0
    %p209 = por %p207, %p208
    %p210 = scmp.ne.s32.totalorder %s199, %s202
    %p211 = scmp.eq.s32.totalorder %s28, 10
    %p212 = por %p210, %p211
    %p213 = scmp.ne.s32.totalorder %s202, %s203
    %p214 = scmp.eq.s32.totalorder %s28, 0
    %p215 = por %p213, %p214
    %p216 = scmp.ne.s32.totalorder %s202, %s203
    %p217 = scmp.eq.s32.totalorder %s29, 10
    %p218 = por %p216, %p217
    %p220 = scmp.ne.s32.totalorder %s203, %s219
    %p221 = scmp.eq.s32.totalorder %s29, 0
    %p222 = por %p220, %p221
    %p223 = scmp.le.s32.totalorder 1, %s23
    %p224 = scmp.lt.s32.totalorder %s23, 12
    %p225 = pnand %p223, %p224
    %p226 = pneg %p225
    // Predicated region
    $region9: #{sparse_moe_forward.1} parent=5 // pred_check
      _
    $region10: #{sparse_moe_forward.1} parent=5 // pred_check_branch
      %228 = sbr.rel (%p225) target = $region12
    $region11: #{sparse_moe_forward.1} parent=5 // pred_region
      %s229 = ssub.s32 %s23, 1
    $region12: #{sparse_moe_forward.1} parent=5 // pred_fallthru
      _
    %p230 = scmp.lt.s32.totalorder %s23, 11
    // Predicated region
    $region13: #{sparse_moe_forward.1} parent=5 // pred_check
      %p231 = pneg %p230
    $region14: #{sparse_moe_forward.1} parent=5 // pred_check_branch
      %233 = sbr.rel (%p231) target = $region16
    $region15: #{sparse_moe_forward.1} parent=5 // pred_region
      // Predicated region
      $region17: #{sparse_moe_forward.1} parent=15 // pred_check
        %p234 = pneg %p55
      $region18: #{sparse_moe_forward.1} parent=15 // pred_check_branch
        %236 = sbr.rel (%p234) target = $region20
      $region19: #{sparse_moe_forward.1} parent=15 // pred_region
        %p237 = scmp.lt.s32.totalorder %s30, 10
        %s238 = scalar_select %p237, %s30, 10
        %s239 = smul.addr %s238, 8
        %s240 = scalar_lea.vmem %s2, %s239
      $region20: #{sparse_moe_forward.1} parent=15 // pred_fallthru
        _
      // Predicated region
      $region21: #{sparse_moe_forward.1} parent=15 // pred_check
        %p241 = pneg %p89
      $region22: #{sparse_moe_forward.1} parent=15 // pred_check_branch
        %243 = sbr.rel (%p241) target = $region24
      $region23: #{sparse_moe_forward.1} parent=15 // pred_region
        %s244 = sld [smem:[#allocation4 + %s30]]
        %s245 = sld [smem:[#allocation5 + %s30]]
        %s246 = smul.u32 %s31, %s245
        %p247 = scmp.lt.s32.totalorder %s244, 7
        %s248 = scalar_select %p247, %s244, 7
        %p249 = scmp.lt.s32.totalorder %s246, 0
        %s250 = scalar_select %p249, %s246, 0
        %s251 = smul.addr %s248, 4
        %s252 = sadd.s32 %s250, %s251
        %s253 = smul.addr %s252, 8
        %s254 = scalar_lea.vmem %s3, %s253
        %s255 = sld [smem:[#allocation4 + %s30]]
        %s256 = sld [smem:[#allocation5 + %s30]]
        %s257 = smul.u32 %s31, %s256
      $region24: #{sparse_moe_forward.1} parent=15 // pred_fallthru
        _
      // Predicated region
      $region25: #{sparse_moe_forward.1} parent=15 // pred_check
        %p258 = pneg %p123
      $region26: #{sparse_moe_forward.1} parent=15 // pred_check_branch
        %260 = sbr.rel (%p258) target = $region28
      $region27: #{sparse_moe_forward.1} parent=15 // pred_region
        %s261 = sld [smem:[#allocation4 + %s30]]
        %s262 = sld [smem:[#allocation5 + %s30]]
        %s263 = smul.u32 %s31, %s262
        %p264 = scmp.lt.s32.totalorder %s261, 7
        %s265 = scalar_select %p264, %s261, 7
        %p266 = scmp.lt.s32.totalorder %s263, 0
        %s267 = scalar_select %p266, %s263, 0
        %s268 = smul.addr %s265, 4
        %s269 = sadd.s32 %s267, %s268
        %s270 = smul.addr %s269, 8
        %s271 = scalar_lea.vmem %s4, %s270
        %s272 = sld [smem:[#allocation4 + %s30]]
        %s273 = sld [smem:[#allocation5 + %s30]]
        %s274 = smul.u32 %s31, %s273
      $region28: #{sparse_moe_forward.1} parent=15 // pred_fallthru
        _
      // Predicated region
      $region29: #{sparse_moe_forward.1} parent=15 // pred_check
        %p275 = pneg %p157
      $region30: #{sparse_moe_forward.1} parent=15 // pred_check_branch
        %277 = sbr.rel (%p275) target = $region32
      $region31: #{sparse_moe_forward.1} parent=15 // pred_region
        %s278 = sld [smem:[#allocation4 + %s30]]
        %s279 = sld [smem:[#allocation5 + %s30]]
        %s280 = smul.u32 %s31, %s279
        %s281 = smul.u32 8, %s280
        %p282 = scmp.lt.s32.totalorder %s278, 7
        %s283 = scalar_select %p282, %s278, 7
        %p284 = scmp.lt.s32.totalorder %s281, 7
        %s285 = scalar_select %p284, %s281, 7
        %s286 = smul.addr %s283, 8
        %s287 = sadd.s32 %s285, %s286
        %s288 = smul.addr %s287, 8
        %s289 = scalar_lea.vmem %s5, %s288
        %s290 = sld [smem:[#allocation4 + %s30]]
        %s291 = sld [smem:[#allocation5 + %s30]]
        %s292 = smul.u32 %s31, %s291
        %s293 = smul.u32 8, %s292
      $region32: #{sparse_moe_forward.1} parent=15 // pred_fallthru
        _
      // Predicated region
      $region33: #{sparse_moe_forward.1} parent=15 // pred_check
        %p294 = pneg %p183
      $region34: #{sparse_moe_forward.1} parent=15 // pred_check_branch
        %296 = sbr.rel (%p294) target = $region36
      $region35: #{sparse_moe_forward.1} parent=15 // pred_region
        %p297 = scmp.lt.s32.totalorder %s30, 10
        %s298 = scalar_select %p297, %s30, 10
        %s299 = smul.addr %s298, 8
        %s300 = scalar_lea.vmem %s6, %s299
      $region36: #{sparse_moe_forward.1} parent=15 // pred_fallthru
        _
    $region16: #{sparse_moe_forward.1} parent=5 // pred_fallthru
      _
    %p301 = scmp.le.s32.totalorder 1, %s23
    %p302 = scmp.lt.s32.totalorder %s23, 12
    %p303 = pnand %p301, %p302
    %p304 = pneg %p303
    // Predicated region
    $region37: #{sparse_moe_forward.1} parent=5 // pred_check
      _
    $region38: #{sparse_moe_forward.1} parent=5 // pred_check_branch
      %306 = sbr.rel (%p303) target = $region40
    $region39: #{sparse_moe_forward.1} parent=5 // pred_region
      %s307 = ssub.s32 %s23, 1
      %p308 = scmp.lt.s32.totalorder %s32, 10
      %s309 = scalar_select %p308, %s32, 10
      %s310 = smul.addr %s309, 8
      %s311 = scalar_lea.vmem %s2, %s310
      %p312 = pneg %p61
      %p313 = pneg %p58
      %s314 = sld [smem:[#allocation4 + %s32]]
      %s315 = sld [smem:[#allocation5 + %s32]]
      %s316 = smul.u32 %s33, %s315
      %p317 = scmp.lt.s32.totalorder %s314, 7
      %s318 = scalar_select %p317, %s314, 7
      %p319 = scmp.lt.s32.totalorder %s316, 0
      %s320 = scalar_select %p319, %s316, 0
      %s321 = smul.addr %s318, 4
      %s322 = sadd.s32 %s320, %s321
      %s323 = smul.addr %s322, 8
      %s324 = scalar_lea.vmem %s3, %s323
      %p325 = pneg %p95
      %p326 = pneg %p92
      %s327 = sld [smem:[#allocation4 + %s32]]
      %s328 = sld [smem:[#allocation5 + %s32]]
      %s329 = smul.u32 %s33, %s328
      %p330 = scmp.lt.s32.totalorder %s327, 7
      %s331 = scalar_select %p330, %s327, 7
      %p332 = scmp.lt.s32.totalorder %s329, 0
      %s333 = scalar_select %p332, %s329, 0
      %s334 = smul.addr %s331, 4
      %s335 = sadd.s32 %s333, %s334
      %s336 = smul.addr %s335, 8
      %s337 = scalar_lea.vmem %s4, %s336
      %p338 = pneg %p129
      %p339 = pneg %p126
      %s340 = sld [smem:[#allocation4 + %s32]]
      %s341 = sld [smem:[#allocation5 + %s32]]
      %s342 = smul.u32 %s33, %s341
      %s343 = smul.u32 8, %s342
      %p344 = scmp.lt.s32.totalorder %s340, 7
      %s345 = scalar_select %p344, %s340, 7
      %p346 = scmp.lt.s32.totalorder %s343, 7
      %s347 = scalar_select %p346, %s343, 7
      %s348 = smul.addr %s345, 8
      %s349 = sadd.s32 %s347, %s348
      %s350 = smul.addr %s349, 8
      %s351 = scalar_lea.vmem %s5, %s350
      %p352 = pneg %p163
      %p353 = pneg %p160
      %p354 = scmp.lt.s32.totalorder %s32, 10
      %s355 = scalar_select %p354, %s32, 10
      %s356 = smul.addr %s355, 8
      %s357 = scalar_lea.vmem %s6, %s356
      %p358 = pneg %p189
      %p359 = pneg %p186
      %p360 = pneg %p215
      %p361 = pneg %p212
      %p362 = scmp.lt.s32.totalorder %s32, 10
      %s363 = scalar_select %p362, %s32, 10
      %s364 = smul.addr %s363, 8
      %s365 = scalar_lea.vmem %s7, %s364
      %p366 = scmp.lt.s32.totalorder %s32, 10
      %s367 = scalar_select %p366, %s32, 10
      %s368 = smul.addr %s367, 8
      %s369 = scalar_lea.vmem %s2, %s368
      %s370 = sld [smem:[#allocation4 + %s32]]
      %s371 = sld [smem:[#allocation5 + %s32]]
      %s372 = smul.u32 %s33, %s371
      %p373 = scmp.lt.s32.totalorder %s370, 7
      %s374 = scalar_select %p373, %s370, 7
      %p375 = scmp.lt.s32.totalorder %s372, 0
      %s376 = scalar_select %p375, %s372, 0
      %s377 = smul.addr %s374, 4
      %s378 = sadd.s32 %s376, %s377
      %s379 = smul.addr %s378, 8
      %s380 = scalar_lea.vmem %s3, %s379
      %s381 = sld [smem:[#allocation4 + %s32]]
      %s382 = sld [smem:[#allocation5 + %s32]]
      %s383 = smul.u32 %s33, %s382
      %s384 = sld [smem:[#allocation4 + %s32]]
      %s385 = sld [smem:[#allocation5 + %s32]]
      %s386 = smul.u32 %s33, %s385
      %p387 = scmp.lt.s32.totalorder %s384, 7
      %s388 = scalar_select %p387, %s384, 7
      %p389 = scmp.lt.s32.totalorder %s386, 0
      %s390 = scalar_select %p389, %s386, 0
      %s391 = smul.addr %s388, 4
      %s392 = sadd.s32 %s390, %s391
      %s393 = smul.addr %s392, 8
      %s394 = scalar_lea.vmem %s4, %s393
      %s395 = sld [smem:[#allocation4 + %s32]]
      %s396 = sld [smem:[#allocation5 + %s32]]
      %s397 = smul.u32 %s33, %s396
      %s398 = sld [smem:[#allocation4 + %s32]]
      %s399 = sld [smem:[#allocation5 + %s32]]
      %s400 = smul.u32 %s33, %s399
      %s401 = smul.u32 8, %s400
      %p402 = scmp.lt.s32.totalorder %s398, 7
      %s403 = scalar_select %p402, %s398, 7
      %p404 = scmp.lt.s32.totalorder %s401, 7
      %s405 = scalar_select %p404, %s401, 7
      %s406 = smul.addr %s403, 8
      %s407 = sadd.s32 %s405, %s406
      %s408 = smul.addr %s407, 8
      %s409 = scalar_lea.vmem %s5, %s408
      %s410 = sld [smem:[#allocation4 + %s32]]
      %s411 = sld [smem:[#allocation5 + %s32]]
      %s412 = smul.u32 %s33, %s411
      %s413 = smul.u32 8, %s412
      %p414 = scmp.lt.s32.totalorder %s32, 10
      %s415 = scalar_select %p414, %s32, 10
      %s416 = smul.addr %s415, 8
      %s417 = scalar_lea.vmem %s6, %s416
      %p418 = scmp.lt.s32.totalorder %s32, 10
      %s419 = scalar_select %p418, %s32, 10
      %s420 = smul.addr %s419, 8
      %s421 = scalar_lea.vmem %s7, %s420
      %p422 = scmp.eq.s32.totalorder %s33, 0
      // Predicated region
      $region41: #{sparse_moe_forward.1} parent=39 // pred_check
        %p423 = pneg %p422
      $region42: #{sparse_moe_forward.1} parent=39 // pred_check_branch
        %425 = sbr.rel (%p423) target = $region44
      $region43: #{sparse_moe_forward.1} parent=39 // pred_region
        %vm426 = vcmask 261120
        %427 = vst.msk [vmem:[#allocation2] sm:$0xff] %vm426, 0.0
      $region44: #{sparse_moe_forward.1} parent=39 // pred_fallthru
        _
      %s428 = sld [smem:[#allocation5 + %s32]]
      %p429 = scmp.gt.s32.totalorder %s428, 0
      // Predicated region
      $region45: #{sparse_moe_forward.1} parent=39 // pred_check
        %p430 = pneg %p429
      $region46: #{sparse_moe_forward.1} parent=39 // pred_check_branch
        %432 = sbr.rel (%p430) target = $region48
      $region47: #{sparse_moe_forward.1} parent=39 // pred_region
        %v433 = vld [vmem:[%s369] sm:$0xff]
        %v434 = vld [vmem:[%s380] sm:$0xff]
        %v435 = vld [vmem:[%s380 + $0x8] sm:$0xff]
        %v436 = vld [vmem:[%s380 + $0x10] sm:$0xff]
        %v437 = vld [vmem:[%s380 + $0x18] sm:$0xff]
        %vm438 = vcmask 261120
        %v440 = vsel %vm438, %v433, 0
        %442 = vmatprep.subr.mxu0 0.0
        %443 = vmatpush1.msra.mxu0 0.0
        %444 = vmatprep.subr.mxu0 0.0
        %445 = vmatpush1.msra.mxu0 0.0
        %446 = vmatprep.subr.mxu0 0.0
        %447 = vmatpush1.msra.mxu0 0.0
        %448 = vmatprep.subr.mxu0 0.0
        %449 = vmatpush1.msra.mxu0 0.0
        %450 = vmatprep.subr.mxu0 0.0
        %451 = vmatpush1.msra.mxu0 0.0
        %452 = vmatprep.subr.mxu0 0.0
        %453 = vmatpush1.msra.mxu0 0.0
        %454 = vmatprep.subr.mxu0 0.0
        %455 = vmatpush1.msra.mxu0 0.0
        %456 = vmatprep.subr.mxu0 0.0
        %457 = vmatpush1.msra.mxu0 0.0
        %458 = vmatprep.subr.mxu0 0.0
        %459 = vmatpush1.msra.mxu0 0.0
        %460 = vmatprep.subr.mxu0 0.0
        %461 = vmatpush1.msra.mxu0 0.0
        %462 = vmatprep.subr.mxu0 0.0
        %463 = vmatpush1.msra.mxu0 0.0
        %464 = vmatprep.subr.mxu0 0.0
        %465 = vmatpush1.msra.mxu0 0.0
        %466 = vmatprep.subr.mxu0 0.0
        %467 = vmatpush1.msra.mxu0 %v437
        %468 = vmatprep.subr.mxu0 0.0
        %469 = vmatpush1.msra.mxu0 %v436
        %470 = vmatprep.subr.mxu0 0.0
        %471 = vmatpush1.msra.mxu0 %v435
        %472 = vmatprep.subr.mxu0 0.0
        %473 = vmatpush1.msra.mxu0 %v434
        %474 = vmatprep.subr.mxu0 0.0
        %475 = vmatpush2.msra.mxu0 0.0
        %476 = vmatprep.subr.mxu0 0.0
        %477 = vmatpush2.msra.mxu0 0.0
        %478 = vmatprep.subr.mxu0 0.0
        %479 = vmatpush2.msra.mxu0 0.0
        %480 = vmatprep.subr.mxu0 0.0
        %481 = vmatpush2.msra.mxu0 0.0
        %482 = vmatprep.subr.mxu0 0.0
        %483 = vmatpush2.msra.mxu0 0.0
        %484 = vmatprep.subr.mxu0 0.0
        %485 = vmatpush2.msra.mxu0 0.0
        %486 = vmatprep.subr.mxu0 0.0
        %487 = vmatpush2.msra.mxu0 0.0
        %488 = vmatprep.subr.mxu0 0.0
        %489 = vmatpush2.msra.mxu0 0.0
        %490 = vmatprep.subr.mxu0 0.0
        %491 = vmatpush2.msra.mxu0 0.0
        %492 = vmatprep.subr.mxu0 0.0
        %493 = vmatpush2.msra.mxu0 0.0
        %494 = vmatprep.subr.mxu0 0.0
        %495 = vmatpush2.msra.mxu0 0.0
        %496 = vmatprep.subr.mxu0 0.0
        %497 = vmatpush2.msra.mxu0 0.0
        %498 = vmatprep.subr.mxu0 0.0
        %499 = vmatpush2.msra.mxu0 0.0
        %500 = vmatprep.subr.mxu0 0.0
        %501 = vmatpush2.msra.mxu0 0.0
        %502 = vmatprep.subr.mxu0 0.0
        %503 = vmatpush2.msra.mxu0 0.0
        %504 = vmatprep.subr.mxu0 0.0
        %505 = vmatpush2.msra.mxu0 0.0
        %506 = vmatprep.mubr.f32.mxu0 0.0
        %507 = vmatmul.mubr.f32.gmra.mxu0 %v440
        %v508 = vpop.f32.mrf.mxu0
        %v509 = vadd.f32 0.0, %v508
        %v510 = vpop.f32.mrf.mxu0
        %511 = vdwg.mxu0
        %v512 = vld [vmem:[%s394] sm:$0xff]
        %v513 = vld [vmem:[%s394 + $0x8] sm:$0xff]
        %v514 = vld [vmem:[%s394 + $0x10] sm:$0xff]
        %v515 = vld [vmem:[%s394 + $0x18] sm:$0xff]
        %516 = vmatprep.subr.mxu0 0.0
        %517 = vmatpush1.msra.mxu0 0.0
        %518 = vmatprep.subr.mxu0 0.0
        %519 = vmatpush1.msra.mxu0 0.0
        %520 = vmatprep.subr.mxu0 0.0
        %521 = vmatpush1.msra.mxu0 0.0
        %522 = vmatprep.subr.mxu0 0.0
        %523 = vmatpush1.msra.mxu0 0.0
        %524 = vmatprep.subr.mxu0 0.0
        %525 = vmatpush1.msra.mxu0 0.0
        %526 = vmatprep.subr.mxu0 0.0
        %527 = vmatpush1.msra.mxu0 0.0
        %528 = vmatprep.subr.mxu0 0.0
        %529 = vmatpush1.msra.mxu0 0.0
        %530 = vmatprep.subr.mxu0 0.0
        %531 = vmatpush1.msra.mxu0 0.0
        %532 = vmatprep.subr.mxu0 0.0
        %533 = vmatpush1.msra.mxu0 0.0
        %534 = vmatprep.subr.mxu0 0.0
        %535 = vmatpush1.msra.mxu0 0.0
        %536 = vmatprep.subr.mxu0 0.0
        %537 = vmatpush1.msra.mxu0 0.0
        %538 = vmatprep.subr.mxu0 0.0
        %539 = vmatpush1.msra.mxu0 0.0
        %540 = vmatprep.subr.mxu0 0.0
        %541 = vmatpush1.msra.mxu0 %v515
        %542 = vmatprep.subr.mxu0 0.0
        %543 = vmatpush1.msra.mxu0 %v514
        %544 = vmatprep.subr.mxu0 0.0
        %545 = vmatpush1.msra.mxu0 %v513
        %546 = vmatprep.subr.mxu0 0.0
        %547 = vmatpush1.msra.mxu0 %v512
        %548 = vmatprep.subr.mxu0 0.0
        %549 = vmatpush2.msra.mxu0 0.0
        %550 = vmatprep.subr.mxu0 0.0
        %551 = vmatpush2.msra.mxu0 0.0
        %552 = vmatprep.subr.mxu0 0.0
        %553 = vmatpush2.msra.mxu0 0.0
        %554 = vmatprep.subr.mxu0 0.0
        %555 = vmatpush2.msra.mxu0 0.0
        %556 = vmatprep.subr.mxu0 0.0
        %557 = vmatpush2.msra.mxu0 0.0
        %558 = vmatprep.subr.mxu0 0.0
        %559 = vmatpush2.msra.mxu0 0.0
        %560 = vmatprep.subr.mxu0 0.0
        %561 = vmatpush2.msra.mxu0 0.0
        %562 = vmatprep.subr.mxu0 0.0
        %563 = vmatpush2.msra.mxu0 0.0
        %564 = vmatprep.subr.mxu0 0.0
        %565 = vmatpush2.msra.mxu0 0.0
        %566 = vmatprep.subr.mxu0 0.0
        %567 = vmatpush2.msra.mxu0 0.0
        %568 = vmatprep.subr.mxu0 0.0
        %569 = vmatpush2.msra.mxu0 0.0
        %570 = vmatprep.subr.mxu0 0.0
        %571 = vmatpush2.msra.mxu0 0.0
        %572 = vmatprep.subr.mxu0 0.0
        %573 = vmatpush2.msra.mxu0 0.0
        %574 = vmatprep.subr.mxu0 0.0
        %575 = vmatpush2.msra.mxu0 0.0
        %576 = vmatprep.subr.mxu0 0.0
        %577 = vmatpush2.msra.mxu0 0.0
        %578 = vmatprep.subr.mxu0 0.0
        %579 = vmatpush2.msra.mxu0 0.0
        %580 = vmatprep.mubr.f32.mxu0 0.0
        %581 = vmatmul.mubr.f32.gmra.mxu0 %v440
        %v582 = vpop.f32.mrf.mxu0
        %v583 = vadd.f32 0.0, %v582
        %v584 = vpop.f32.mrf.mxu0
        %585 = vdwg.mxu0
        %v586 = vxor.u32 %v509, 2147483648
        %v587 = vmul.f32 %v586, 1.442695
        %v588 = vpow.pop %v587
        %v589 = vadd.f32 %v588, 1.0
        %v590 = vrcp.pop %v589
        %v591 = vmul.f32 1.0, %v590
        %v592 = vmul.f32 %v509, %v591
        %v593 = vmul.f32 %v592, %v583
        %v594 = vld [vmem:[%s417] sm:$0xff]
        %596 = vset.pattern.permute.xlu0 0
        %597 = vperm.xlu0 %596, %v594
        %v598 = vpop.permute.xlu0 %597
        %v600 = vmul.f32 %v593, %v598
        %v601 = vld [vmem:[#allocation2] sm:$0xff]
        %v602 = vld [vmem:[%s409] sm:$0xff]
        %v603 = vld [vmem:[%s409 + $0x8] sm:$0xff]
        %v604 = vld [vmem:[%s409 + $0x10] sm:$0xff]
        %v605 = vld [vmem:[%s409 + $0x18] sm:$0xff]
        %v606 = vld [vmem:[%s409 + $0x20] sm:$0xff]
        %v607 = vld [vmem:[%s409 + $0x28] sm:$0xff]
        %v608 = vld [vmem:[%s409 + $0x30] sm:$0xff]
        %v609 = vld [vmem:[%s409 + $0x38] sm:$0xff]
        %vm610 = vcmask 523264
        %v612 = vsel %vm610, %v600, 0
        %614 = vmatprep.subr.mxu0 0.0
        %615 = vmatpush1.msra.mxu0 0.0
        %616 = vmatprep.subr.mxu0 0.0
        %617 = vmatpush1.msra.mxu0 0.0
        %618 = vmatprep.subr.mxu0 0.0
        %619 = vmatpush1.msra.mxu0 0.0
        %620 = vmatprep.subr.mxu0 0.0
        %621 = vmatpush1.msra.mxu0 0.0
        %622 = vmatprep.subr.mxu0 0.0
        %623 = vmatpush1.msra.mxu0 0.0
        %624 = vmatprep.subr.mxu0 0.0
        %625 = vmatpush1.msra.mxu0 0.0
        %626 = vmatprep.subr.mxu0 0.0
        %627 = vmatpush1.msra.mxu0 0.0
        %628 = vmatprep.subr.mxu0 0.0
        %629 = vmatpush1.msra.mxu0 0.0
        %630 = vmatprep.subr.mxu0 0.0
        %631 = vmatpush1.msra.mxu0 %v609
        %632 = vmatprep.subr.mxu0 0.0
        %633 = vmatpush1.msra.mxu0 %v608
        %634 = vmatprep.subr.mxu0 0.0
        %635 = vmatpush1.msra.mxu0 %v607
        %636 = vmatprep.subr.mxu0 0.0
        %637 = vmatpush1.msra.mxu0 %v606
        %638 = vmatprep.subr.mxu0 0.0
        %639 = vmatpush1.msra.mxu0 %v605
        %640 = vmatprep.subr.mxu0 0.0
        %641 = vmatpush1.msra.mxu0 %v604
        %642 = vmatprep.subr.mxu0 0.0
        %643 = vmatpush1.msra.mxu0 %v603
        %644 = vmatprep.subr.mxu0 0.0
        %645 = vmatpush1.msra.mxu0 %v602
        %646 = vmatprep.subr.mxu0 0.0
        %647 = vmatpush2.msra.mxu0 0.0
        %648 = vmatprep.subr.mxu0 0.0
        %649 = vmatpush2.msra.mxu0 0.0
        %650 = vmatprep.subr.mxu0 0.0
        %651 = vmatpush2.msra.mxu0 0.0
        %652 = vmatprep.subr.mxu0 0.0
        %653 = vmatpush2.msra.mxu0 0.0
        %654 = vmatprep.subr.mxu0 0.0
        %655 = vmatpush2.msra.mxu0 0.0
        %656 = vmatprep.subr.mxu0 0.0
        %657 = vmatpush2.msra.mxu0 0.0
        %658 = vmatprep.subr.mxu0 0.0
        %659 = vmatpush2.msra.mxu0 0.0
        %660 = vmatprep.subr.mxu0 0.0
        %661 = vmatpush2.msra.mxu0 0.0
        %662 = vmatprep.subr.mxu0 0.0
        %663 = vmatpush2.msra.mxu0 0.0
        %664 = vmatprep.subr.mxu0 0.0
        %665 = vmatpush2.msra.mxu0 0.0
        %666 = vmatprep.subr.mxu0 0.0
        %667 = vmatpush2.msra.mxu0 0.0
        %668 = vmatprep.subr.mxu0 0.0
        %669 = vmatpush2.msra.mxu0 0.0
        %670 = vmatprep.subr.mxu0 0.0
        %671 = vmatpush2.msra.mxu0 0.0
        %672 = vmatprep.subr.mxu0 0.0
        %673 = vmatpush2.msra.mxu0 0.0
        %674 = vmatprep.subr.mxu0 0.0
        %675 = vmatpush2.msra.mxu0 0.0
        %676 = vmatprep.subr.mxu0 0.0
        %677 = vmatpush2.msra.mxu0 0.0
        %678 = vmatprep.mubr.f32.mxu0 0.0
        %679 = vmatmul.mubr.f32.gmra.mxu0 %v612
        %v680 = vpop.f32.mrf.mxu0
        %v681 = vadd.f32 0.0, %v680
        %v682 = vpop.f32.mrf.mxu0
        %683 = vdwg.mxu0
        %v684 = vadd.f32 %v601, %v681
        %685 = vst.msk [vmem:[#allocation2] sm:$0xff] %vm438, %v684
      $region48: #{sparse_moe_forward.1} parent=39 // pred_fallthru
        _
      // Predicated region
      $region49: #{sparse_moe_forward.1} parent=39 // pred_check
        %p686 = pneg %p422
      $region50: #{sparse_moe_forward.1} parent=39 // pred_check_branch
        %688 = sbr.rel (%p686) target = $region52
      $region51: #{sparse_moe_forward.1} parent=39 // pred_region
        %v689 = vld [vmem:[#allocation2] sm:$0xff]
        %vm690 = vcmask 261120
        %691 = vst.msk [vmem:[%s421] sm:$0xff] %vm690, %v689
      $region52: #{sparse_moe_forward.1} parent=39 // pred_fallthru
        _
      %p692 = scmp.lt.s32.totalorder %s32, 10
      %s693 = scalar_select %p692, %s32, 10
      %s694 = smul.addr %s693, 8
      %s695 = scalar_lea.vmem %s7, %s694
      // Predicated region
      $region53: #{sparse_moe_forward.1} parent=39 // pred_check
        %p696 = pneg %p212
      $region54: #{sparse_moe_forward.1} parent=39 // pred_check_branch
        %698 = sbr.rel (%p696) target = $region56
      $region55: #{sparse_moe_forward.1} parent=39 // pred_region
        _
      $region56: #{sparse_moe_forward.1} parent=39 // pred_fallthru
        _
    $region40: #{sparse_moe_forward.1} parent=5 // pred_fallthru
      _
    %p699 = scmp.le.s32.totalorder 2, %s23
    // Predicated region
    $region57: #{sparse_moe_forward.1} parent=5 // pred_check
      %p700 = pneg %p699
    $region58: #{sparse_moe_forward.1} parent=5 // pred_check_branch
      %702 = sbr.rel (%p700) target = $region60
    $region59: #{sparse_moe_forward.1} parent=5 // pred_region
      %s703 = ssub.s32 %s23, 2
      // Predicated region
      $region61: #{sparse_moe_forward.1} parent=59 // pred_check
        %p704 = pneg %p218
      $region62: #{sparse_moe_forward.1} parent=59 // pred_check_branch
        %706 = sbr.rel (%p704) target = $region64
      $region63: #{sparse_moe_forward.1} parent=59 // pred_region
        %p707 = scmp.lt.s32.totalorder %s34, 10
        %s708 = scalar_select %p707, %s34, 10
        %s709 = smul.addr %s708, 8
        %s710 = scalar_lea.vmem %s7, %s709
      $region64: #{sparse_moe_forward.1} parent=59 // pred_fallthru
        _
    $region60: #{sparse_moe_forward.1} parent=5 // pred_fallthru
      _
  $region6: #{sparse_moe_forward.1} parent=0 // loop_footer
    %s27 = sadd.s32 1, %s23
  $region7: #{sparse_moe_forward.1} parent=0 // loop_footer_branch
    %22 = sbr.rel target = $region3
  $region8: #{sparse_moe_forward.1} parent=0 // loop_exit
    _

</llo_original>
